<compile_context>
chip_gen: v5e
topology: v5e:2x2
jax: 0.10.0
libtpu: 0.0.40
codegen_flags: <defaults>
</compile_context>

<pallas_src>
import jax
import jax.numpy as jnp
from jax.experimental import pallas as pl
from jax.experimental.pallas import tpu as pltpu


def _round_up(x, m):
    return m * ((x + m - 1) // m)


def _vmem_capacity_bytes():
    try:
        return int(pltpu.get_tpu_info().vmem_capacity_bytes)
    except Exception:
        return 64 * 2 ** 20  # conservative: v7x per-TensorCore VMEM


# ---------------------------------------------------------------------------
# Kernels
# ---------------------------------------------------------------------------
def _head_kernel_single(x_ref, w1_ref, b1_ref, w2_ref, b2_ref, o_ref):
    """Whole (padded) hidden dim resident: one pass, no accumulator scratch."""
    # Cast CLS activations to the MXU compute dtype on the VPU (overlaps MXU).
    x = x_ref[...].astype(w1_ref.dtype)
    h = jnp.dot(x, w1_ref[...], preferred_element_type=jnp.float32)
    h = jnp.tanh(h + b1_ref[...].astype(jnp.float32))         # f32 bias + EUP tanh
    o = jnp.dot(h.astype(w2_ref.dtype), w2_ref[...],
                preferred_element_type=jnp.float32)
    o_ref[...] = (o + b2_ref[...].astype(jnp.float32)).astype(o_ref.dtype)


def _head_kernel_multi(x_ref, w1_ref, b1_ref, w2_ref, b2_ref, o_ref, acc_ref):
    """Hidden dim tiled along an 'arbitrary' reduction axis; f32 accumulator."""
    j = pl.program_id(1)

    @pl.when(j == 0)
    def _init():
        acc_ref[...] = jnp.zeros_like(acc_ref)

    x = x_ref[...].astype(w1_ref.dtype)
    h = jnp.dot(x, w1_ref[...], preferred_element_type=jnp.float32)
    h = jnp.tanh(h + b1_ref[...].astype(jnp.float32))
    acc_ref[...] += jnp.dot(h.astype(w2_ref.dtype), w2_ref[...],
                            preferred_element_type=jnp.float32)

    @pl.when(j == pl.num_programs(1) - 1)
    def _finalize():
        o_ref[...] = (acc_ref[...]
                      + b2_ref[...].astype(jnp.float32)).astype(o_ref.dtype)


# ---------------------------------------------------------------------------
# Wrapper
# ---------------------------------------------------------------------------
def bert_classification_head(features, w_dense, b_dense, w_out, b_out, *,
                             compute_dtype=jnp.bfloat16,
                             batch_tile=512, hidden_tile=512,
                             single_pass=None):
    """features: [B, S, H]. Returns logits [B, C] (eval mode: dropout = identity)."""
    B, S, H = features.shape
    H_out = w_dense.shape[1]
    C = w_out.shape[1]
    out_dtype = features.dtype

    x_size = jnp.dtype(features.dtype).itemsize
    w_size = jnp.dtype(compute_dtype).itemsize
    o_size = jnp.dtype(out_dtype).itemsize

    # ---- tile sizes ----------------------------------------------------------
    Cp = 128 * pl.cdiv(C, 128)                     # lane-dense logits (unmasked vst)
    align = 256 if H_out >= 256 else 128           # fill 256-wide MXU columns
    Hp_full = _round_up(H_out, align)

    if B <= 8:
        tb = B
    else:
        tb = min(batch_tile, _round_up(B, 8))
        if pl.cdiv(B, tb) < 2:                     # give both v7x TensorCores a tile
            tb = _round_up(pl.cdiv(B, 2), 8)
    num_b = pl.cdiv(B, tb)

    vmem_cap = _vmem_capacity_bytes()
    # VMEM needed to keep the whole padded hidden dim resident (2x = double buffer).
    resident_bytes = (2 * (H * Hp_full + Hp_full * Cp) * w_size
                      + 2 * (Hp_full + Cp) * 4
                      + 2 * tb * H * x_size
                      + 2 * tb * Cp * o_size)
    if single_pass is None:
        single_pass = resident_bytes <= int(0.6 * vmem_cap)

    if single_pass:
        tk = Hp = Hp_full
    else:
        tk = _round_up(min(hidden_tile, H_out), align)
        Hp = tk * pl.cdiv(H_out, tk)

    # ---- parameters: cast matmul weights to compute dtype, zero-pad ----------
    # Padded Hp columns: b1 pad = 0 -> tanh(0) = 0 -> hit zero rows of W2 -> 0.
    # Padded Cp columns are sliced off at the end.
    w1 = w_dense.astype(compute_dtype)
    w2 = w_out.astype(compute_dtype)
    b1 = b_dense.astype(jnp.float32)
    b2 = b_out.astype(jnp.float32)
    if Hp != H_out:
        w1 = jnp.pad(w1, ((0, 0), (0, Hp - H_out)))
        b1 = jnp.pad(b1, (0, Hp - H_out))
        w2 = jnp.pad(w2, ((0, Hp - H_out), (0, 0)))
    if Cp != C:
        w2 = jnp.pad(w2, ((0, 0), (0, Cp - C)))
        b2 = jnp.pad(b2, (0, Cp - C))
    b1 = b1.reshape(1, Hp)
    b2 = b2.reshape(1, Cp)

    # ---- CLS slice fused into the BlockSpec -----------------------------------
    if H % 128 == 0 or S == 1:
        # Row-major reshape is free; columns [0:H) of each row == features[:, 0, :],
        # so the x BlockSpec DMAs only the CLS rows straight from HBM.
        x = features.reshape(B, S * H)
    else:
        # TODO(synk): non-lane-aligned hidden sizes fall back to a wrapper slice.
        x = features[:, 0, :]

    # ---- cost / VMEM hints -----------------------------------------------------
    flops = 2 * B * H * Hp + 2 * B * Hp * Cp
    # Single-pass: weight block indices are constant -> fetched once.  Multi-pass:
    # weights re-stream once per batch tile.
    weight_passes = 1 if single_pass else num_b
    bytes_accessed = (x_size * B * H
                      + weight_passes * (w_size * (H * Hp + Hp * Cp) + 4 * (Hp + Cp))
                      + o_size * B * Cp)
    cost = pl.CostEstimate(flops=flops, transcendentals=B * Hp,
                           bytes_accessed=bytes_accessed)

    vmem_est = (2 * (H * tk + tk * Cp) * w_size + 2 * (tk + Cp) * 4
                + 2 * tb * H * x_size + 2 * tb * Cp * o_size
                + (0 if single_pass else tb * Cp * 4))
    vmem_limit = int(min(0.7 * vmem_cap, max(32 * 2 ** 20, 1.25 * vmem_est)))

    out_shape = jax.ShapeDtypeStruct((B, Cp), out_dtype)

    if single_pass:
        out = pl.pallas_call(
            _head_kernel_single,
            out_shape=out_shape,
            grid=(num_b,),
            in_specs=[
                pl.BlockSpec((tb, H), lambda i: (i, 0)),      # CLS activations
                pl.BlockSpec((H, Hp), lambda i: (0, 0)),      # W1 (resident)
                pl.BlockSpec((1, Hp), lambda i: (0, 0)),      # b1 (resident)
                pl.BlockSpec((Hp, Cp), lambda i: (0, 0)),     # W2 (resident)
                pl.BlockSpec((1, Cp), lambda i: (0, 0)),      # b2 (resident)
            ],
            out_specs=pl.BlockSpec((tb, Cp), lambda i: (i, 0)),
            compiler_params=pltpu.CompilerParams(
                dimension_semantics=("parallel",),
                vmem_limit_bytes=vmem_limit),
            cost_estimate=cost,
        )(x, w1, b1, w2, b2)
    else:
        out = pl.pallas_call(
            _head_kernel_multi,
            out_shape=out_shape,
            grid=(num_b, Hp // tk),
            in_specs=[
                pl.BlockSpec((tb, H), lambda i, j: (i, 0)),   # CLS activations
                pl.BlockSpec((H, tk), lambda i, j: (0, j)),   # W1 column tile
                pl.BlockSpec((1, tk), lambda i, j: (0, j)),   # b1 tile
                pl.BlockSpec((tk, Cp), lambda i, j: (j, 0)),  # W2 row tile
                pl.BlockSpec((1, Cp), lambda i, j: (0, 0)),   # b2 (resident)
            ],
            out_specs=pl.BlockSpec((tb, Cp), lambda i, j: (i, 0)),
            scratch_shapes=[pltpu.VMEM((tb, Cp), jnp.float32)],
            compiler_params=pltpu.CompilerParams(
                dimension_semantics=("parallel", "arbitrary"),
                vmem_limit_bytes=vmem_limit),
            cost_estimate=cost,
        )(x, w1, b1, w2, b2)

    return out[:, :C]


def _reference(features, w_dense, b_dense, w_out, b_out):
    x = features[:, 0, :]
    x = jnp.tanh(x @ w_dense + b_dense)
    return x @ w_out + b_out


if __name__ == "__main__":
    # --- Test 1: normal shape class (single-pass fast path, bf16 MXU) ---------
    B, S, H, C = 2, 8, 128, 3
    k_feat, k_w1, k_b1, k_w2, k_b2 = jax.random.split(jax.random.PRNGKey(0), 5)
    features = jax.random.normal(k_feat, (B, S, H), dtype=jnp.float32)
    w_dense = jax.random.normal(k_w1, (H, H), dtype=jnp.float32) * 0.05
    b_dense = jax.random.normal(k_b1, (H,), dtype=jnp.float32) * 0.05
    w_out = jax.random.normal(k_w2, (H, C), dtype=jnp.float32) * 0.05
    b_out = jax.random.normal(k_b2, (C,), dtype=jnp.float32) * 0.05

    logits = jax.block_until_ready(
        bert_classification_head(features, w_dense, b_dense, w_out, b_out))
    ref = _reference(features, w_dense, b_dense, w_out, b_out)
    assert logits.shape == (B, C)
    err = jnp.max(jnp.abs(logits - ref))
    assert jnp.allclose(logits, ref, atol=3e-2, rtol=3e-2), \
        f"bf16 single-pass path: max abs err {err}"

    # --- Test 2: forced multi-pass reduction path, f32 for a tight check ------
    B2, S2, H2, C2 = 2, 8, 512, 3
    k_feat, k_w1, k_b1, k_w2, k_b2 = jax.random.split(jax.random.PRNGKey(1), 5)
    features2 = jax.random.normal(k_feat, (B2, S2, H2), dtype=jnp.float32)
    w_dense2 = jax.random.normal(k_w1, (H2, H2), dtype=jnp.float32) * 0.02
    b_dense2 = jax.random.normal(k_b1, (H2,), dtype=jnp.float32) * 0.02
    w_out2 = jax.random.normal(k_w2, (H2, C2), dtype=jnp.float32) * 0.02
    b_out2 = jax.random.normal(k_b2, (C2,), dtype=jnp.float32) * 0.02

    logits2 = jax.block_until_ready(
        bert_classification_head(features2, w_dense2, b_dense2, w_out2, b_out2,
                                 compute_dtype=jnp.float32,
                                 hidden_tile=256, single_pass=False))
    ref2 = _reference(features2, w_dense2, b_dense2, w_out2, b_out2)
    assert logits2.shape == (B2, C2)
    err2 = jnp.max(jnp.abs(logits2 - ref2))
    assert jnp.allclose(logits2, ref2, atol=1e-3, rtol=1e-3), \
        f"f32 multi-pass path: max abs err {err2}"

    print("KERNEL_OK")
</pallas_src>

<mosaic_0001>
module attributes {stable_mosaic.version = 11 : i64} {
  func.func @_head_kernel_single(%arg0: i32, %arg1: memref<2x128xf32, #tpu.memory_space<vmem>>, %arg2: memref<128x128xbf16, #tpu.memory_space<vmem>>, %arg3: memref<1x128xf32, #tpu.memory_space<vmem>>, %arg4: memref<128x128xbf16, #tpu.memory_space<vmem>>, %arg5: memref<1x128xf32, #tpu.memory_space<vmem>>, %arg6: memref<2x128xf32, #tpu.memory_space<vmem>>) attributes {dimension_semantics = [#tpu.dimension_semantics<parallel>], iteration_bounds = array<i64: 1>, scalar_prefetch = 0 : i64, scratch_operands = 0 : i64, tpu.core_type = #tpu.core_type<tc>, window_params = [{transform_indices = @transform_0, window_bounds = array<i64: 2, 128>}, {pipeline_mode = #tpu.pipeline_mode<synchronous>, transform_indices = @transform_1, window_bounds = array<i64: 128, 128>}, {pipeline_mode = #tpu.pipeline_mode<synchronous>, transform_indices = @transform_2, window_bounds = array<i64: 1, 128>}, {pipeline_mode = #tpu.pipeline_mode<synchronous>, transform_indices = @transform_3, window_bounds = array<i64: 128, 128>}, {pipeline_mode = #tpu.pipeline_mode<synchronous>, transform_indices = @transform_4, window_bounds = array<i64: 1, 128>}, {transform_indices = @transform_5, window_bounds = array<i64: 2, 128>}]} {
    %c0 = arith.constant 0 : index
    %c0_0 = arith.constant 0 : index
    %0 = vector.load %arg1[%c0, %c0_0] : memref<2x128xf32, #tpu.memory_space<vmem>>, vector<2x128xf32>
    %1 = arith.truncf %0 : vector<2x128xf32> to vector<2x128xbf16>
    %c0_1 = arith.constant 0 : index
    %c0_2 = arith.constant 0 : index
    %2 = vector.load %arg2[%c0_1, %c0_2] : memref<128x128xbf16, #tpu.memory_space<vmem>>, vector<128x128xbf16>
    %cst = arith.constant dense<0.000000e+00> : vector<2x128xf32>
    %3 = tpu.matmul %1, %2, %cst {dimension_numbers = #tpu.dot_dimension_numbers<[1], [0], [0], [1], [0, 0, 1, 1], [], []>} : vector<2x128xbf16>, vector<128x128xbf16>, vector<2x128xf32> -> vector<2x128xf32>
    %c0_3 = arith.constant 0 : index
    %c0_4 = arith.constant 0 : index
    %4 = vector.load %arg3[%c0_3, %c0_4] : memref<1x128xf32, #tpu.memory_space<vmem>>, vector<1x128xf32>
    %5 = vector.broadcast %4 : vector<1x128xf32> to vector<2x128xf32>
    %6 = arith.addf %3, %5 : vector<2x128xf32>
    %7 = math.tanh %6 : vector<2x128xf32>
    %8 = arith.truncf %7 : vector<2x128xf32> to vector<2x128xbf16>
    %c0_5 = arith.constant 0 : index
    %c0_6 = arith.constant 0 : index
    %9 = vector.load %arg4[%c0_5, %c0_6] : memref<128x128xbf16, #tpu.memory_space<vmem>>, vector<128x128xbf16>
    %cst_7 = arith.constant dense<0.000000e+00> : vector<2x128xf32>
    %10 = tpu.matmul %8, %9, %cst_7 {dimension_numbers = #tpu.dot_dimension_numbers<[1], [0], [0], [1], [0, 0, 1, 1], [], []>} : vector<2x128xbf16>, vector<128x128xbf16>, vector<2x128xf32> -> vector<2x128xf32>
    %c0_8 = arith.constant 0 : index
    %c0_9 = arith.constant 0 : index
    %11 = vector.load %arg5[%c0_8, %c0_9] : memref<1x128xf32, #tpu.memory_space<vmem>>, vector<1x128xf32>
    %12 = vector.broadcast %11 : vector<1x128xf32> to vector<2x128xf32>
    %13 = arith.addf %10, %12 : vector<2x128xf32>
    %c0_10 = arith.constant 0 : index
    %c0_11 = arith.constant 0 : index
    %14 = vector.load %arg6[%c0_10, %c0_11] : memref<2x128xf32, #tpu.memory_space<vmem>>, vector<2x128xf32>
    tpu.vector_store %arg6[%c0_10, %c0_11], %13 {strides = array<i32>} : memref<2x128xf32, #tpu.memory_space<vmem>>, vector<2x128xf32>,
    return
  }
  func.func @transform_0(%arg0: i32) -> (i32, i32) {
    %c0_i32 = arith.constant 0 : i32
    %c0_i32_0 = arith.constant 0 : i32
    return %arg0, %c0_i32 : i32, i32
  }
  func.func @transform_1(%arg0: i32) -> (i32, i32) {
    %c0_i32 = arith.constant 0 : i32
    %c0_i32_0 = arith.constant 0 : i32
    %c0_i32_1 = arith.constant 0 : i32
    return %c0_i32, %c0_i32_0 : i32, i32
  }
  func.func @transform_2(%arg0: i32) -> (i32, i32) {
    %c0_i32 = arith.constant 0 : i32
    %c0_i32_0 = arith.constant 0 : i32
    %c0_i32_1 = arith.constant 0 : i32
    return %c0_i32, %c0_i32_0 : i32, i32
  }
  func.func @transform_3(%arg0: i32) -> (i32, i32) {
    %c0_i32 = arith.constant 0 : i32
    %c0_i32_0 = arith.constant 0 : i32
    %c0_i32_1 = arith.constant 0 : i32
    return %c0_i32, %c0_i32_0 : i32, i32
  }
  func.func @transform_4(%arg0: i32) -> (i32, i32) {
    %c0_i32 = arith.constant 0 : i32
    %c0_i32_0 = arith.constant 0 : i32
    %c0_i32_1 = arith.constant 0 : i32
    return %c0_i32, %c0_i32_0 : i32, i32
  }
  func.func @transform_5(%arg0: i32) -> (i32, i32) {
    %c0_i32 = arith.constant 0 : i32
    %c0_i32_0 = arith.constant 0 : i32
    return %arg0, %c0_i32 : i32, i32
  }
}

</mosaic_0001>

<llo_original>
// kernel: tpu_custom_call.1
$region0: #{tpu_custom_call.1}
  #allocation0 [shape = 'u32[]', space=smem, size = 0x4, offset = 0x4, fixed_abs, tag = 'smem constant byte address 0x4 - core index']
  #allocation1 [shape = 'u32[72,128]{1,0:T(1,128)}', space=vmem, size = 0x9000, scoped, tag = 'internal scratch']
  %s0 = inlined_call_operand.hbm [shape: f32[2,1024], index: 0, kind: input, shape index: {}]
  %s1 = inlined_call_operand.hbm [shape: bf16[128,128], index: 1, kind: input, shape index: {}]
  %s2 = inlined_call_operand.vmem [shape: f32[1,128], index: 2, kind: input, shape index: {}]
  %s3 = inlined_call_operand.hbm [shape: bf16[128,128], index: 3, kind: input, shape index: {}]
  %s4 = inlined_call_operand.vmem [shape: f32[1,128], index: 4, kind: input, shape index: {}]
  %s5 = inlined_call_operand.hbm [shape: f32[2,128], index: 5, kind: output, shape index: {}]
  %s6 = sld [smem:[#allocation0]]
  $region42: #{tpu_custom_call.1} parent=0
    _
  %s8 = ssub.s32 1, %s6
  %s9 = scalar_select 0, %s8, %s6
  $region1: #{tpu_custom_call.1} parent=0
    #allocation2 [shape = 'u8[1024]{0}', space=vmem, size = 0x400, scoped, tag = 'input window, operand 0, single buffered']
    #allocation3 [shape = 's32[1]{0}', space=sflag, size = 0x4, scoped, tag = 'scoped memory for tpu_custom_call.1']
    #allocation4 [shape = 's32[1]{0}', space=sflag, size = 0x4, scoped, tag = 'scoped memory for tpu_custom_call.1']
    #allocation5 [shape = 'u8[32768]{0}', space=vmem, size = 0x8000, scoped, tag = 'input window, operand 1, single buffered']
    #allocation6 [shape = 's32[1]{0}', space=sflag, size = 0x4, scoped, tag = 'scoped memory for tpu_custom_call.1']
    #allocation7 [shape = 'u8[32768]{0}', space=vmem, size = 0x8000, scoped, tag = 'input window, operand 3, single buffered']
    #allocation8 [shape = 'u8[1024]{0}', space=vmem, size = 0x400, scoped, tag = 'output window, operand 0, single buffered']
    %10 = vsyncpa [#allocation3], 0
    %11 = vsyncpa [#allocation6], 0
    %12 = vsyncpa [#allocation4], 0
    // Predicated region
    $region2: #{tpu_custom_call.1} parent=1 // pred_check
      _
    $region3: #{tpu_custom_call.1} parent=1 // pred_check_branch
      %14 = sbr.rel (0) target = $region5
    $region4: #{tpu_custom_call.1} parent=1 // pred_region
      %16 = vsyncadd [#allocation3], 0
      %s18 = sshll.u32 %s0, 4
      %s19 = int_to_ptr.hbm [resolvable:$true] %s18
      %s20 = sshll.u32 [#allocation2], 4
      %s21 = int_to_ptr.vmem [resolvable:$true] %s20
      %23 = dma.hbm_to_vmem [thread:$0]  %s19, 32, %s21, [#allocation3]
    $region5: #{tpu_custom_call.1} parent=1 // pred_fallthru
      _
    // Predicated region
    $region6: #{tpu_custom_call.1} parent=1 // pred_check
      _
    $region7: #{tpu_custom_call.1} parent=1 // pred_check_branch
      %25 = sbr.rel (0) target = $region9
    $region8: #{tpu_custom_call.1} parent=1 // pred_region
      %27 = vsyncadd [#allocation6], 0
      %s28 = sshll.u32 %s1, 4
      %s29 = int_to_ptr.hbm [resolvable:$true] %s28
      %s30 = sshll.u32 [#allocation5], 4
      %s31 = int_to_ptr.vmem [resolvable:$true] %s30
      %36 = dma.hbm_to_vmem [thread:$0]  %s29, 1024, %s31, [#allocation6], 64, 64, 4
    $region9: #{tpu_custom_call.1} parent=1 // pred_fallthru
      _
    // Predicated region
    $region10: #{tpu_custom_call.1} parent=1 // pred_check
      _
    $region11: #{tpu_custom_call.1} parent=1 // pred_check_branch
      %38 = sbr.rel (0) target = $region13
    $region12: #{tpu_custom_call.1} parent=1 // pred_region
      _
    $region13: #{tpu_custom_call.1} parent=1 // pred_fallthru
      _
    // Predicated region
    $region14: #{tpu_custom_call.1} parent=1 // pred_check
      _
    $region15: #{tpu_custom_call.1} parent=1 // pred_check_branch
      %40 = sbr.rel (0) target = $region17
    $region16: #{tpu_custom_call.1} parent=1 // pred_region
      %42 = vsyncadd [#allocation6], 0
      %s43 = sshll.u32 %s3, 4
      %s44 = int_to_ptr.hbm [resolvable:$true] %s43
      %s45 = sshll.u32 [#allocation7], 4
      %s46 = int_to_ptr.vmem [resolvable:$true] %s45
      %51 = dma.hbm_to_vmem [thread:$0]  %s44, 1024, %s46, [#allocation6], 64, 64, 4
    $region17: #{tpu_custom_call.1} parent=1 // pred_fallthru
      _
    // Predicated region
    $region18: #{tpu_custom_call.1} parent=1 // pred_check
      _
    $region19: #{tpu_custom_call.1} parent=1 // pred_check_branch
      %53 = sbr.rel (0) target = $region21
    $region20: #{tpu_custom_call.1} parent=1 // pred_region
      _
    $region21: #{tpu_custom_call.1} parent=1 // pred_fallthru
      _
    // Predicated region
    $region22: #{tpu_custom_call.1} parent=1 // pred_check
      _
    $region23: #{tpu_custom_call.1} parent=1 // pred_check_branch
      %55 = sbr.rel (0) target = $region25
    $region24: #{tpu_custom_call.1} parent=1 // pred_region
      %57 = dma.done [#allocation3], 32
    $region25: #{tpu_custom_call.1} parent=1 // pred_fallthru
      _
    // Predicated region
    $region26: #{tpu_custom_call.1} parent=1 // pred_check
      _
    $region27: #{tpu_custom_call.1} parent=1 // pred_check_branch
      %59 = sbr.rel (0) target = $region29
    $region28: #{tpu_custom_call.1} parent=1 // pred_region
      %61 = dma.done [#allocation6], 1024
    $region29: #{tpu_custom_call.1} parent=1 // pred_fallthru
      _
    // Predicated region
    $region30: #{tpu_custom_call.1} parent=1 // pred_check
      _
    $region31: #{tpu_custom_call.1} parent=1 // pred_check_branch
      %63 = sbr.rel (0) target = $region33
    $region32: #{tpu_custom_call.1} parent=1 // pred_region
      %65 = dma.done [#allocation6], 1024
    $region33: #{tpu_custom_call.1} parent=1 // pred_fallthru
      _
    %v66 = vld [vmem:[#allocation2] sm:$0x3]
    %v67 = vpack.c.bf16 %v66, %v66
    %v68 = vld [vmem:[#allocation5] sm:$0xf]
    %v69 = vld [vmem:[#allocation5 + $0x4] sm:$0xf]
    %v70 = vld [vmem:[#allocation5 + $0x8] sm:$0xf]
    %v71 = vld [vmem:[#allocation5 + $0xc] sm:$0xf]
    %v72 = vld [vmem:[#allocation5 + $0x10] sm:$0xf]
    %v73 = vld [vmem:[#allocation5 + $0x14] sm:$0xf]
    %v74 = vld [vmem:[#allocation5 + $0x18] sm:$0xf]
    %v75 = vld [vmem:[#allocation5 + $0x1c] sm:$0xf]
    %v76 = vld [vmem:[#allocation5 + $0x20] sm:$0xf]
    %v77 = vld [vmem:[#allocation5 + $0x24] sm:$0xf]
    %v78 = vld [vmem:[#allocation5 + $0x28] sm:$0xf]
    %v79 = vld [vmem:[#allocation5 + $0x2c] sm:$0xf]
    %v80 = vld [vmem:[#allocation5 + $0x30] sm:$0xf]
    %v81 = vld [vmem:[#allocation5 + $0x34] sm:$0xf]
    %v82 = vld [vmem:[#allocation5 + $0x38] sm:$0xf]
    %v83 = vld [vmem:[#allocation5 + $0x3c] sm:$0xf]
    %v84 = vld [vmem:[%s2] sm:$0x1]
    %v86 = vperm.slane %v84, 0
    %v104 = vunpack.c.l.b16 %v68
    %v105 = vunpack.c.l.b16 %v69
    %v106 = vunpack.c.l.b16 %v70
    %v107 = vunpack.c.l.b16 %v71
    %v108 = vunpack.c.l.b16 %v72
    %v109 = vunpack.c.l.b16 %v73
    %v110 = vunpack.c.l.b16 %v74
    %v111 = vunpack.c.l.b16 %v75
    %v112 = vunpack.c.l.b16 %v76
    %v113 = vunpack.c.l.b16 %v77
    %v114 = vunpack.c.l.b16 %v78
    %v115 = vunpack.c.l.b16 %v79
    %v116 = vunpack.c.l.b16 %v80
    %v117 = vunpack.c.l.b16 %v81
    %v118 = vunpack.c.l.b16 %v82
    %v119 = vunpack.c.l.b16 %v83
    %v120 = vpack.c.b16 %v105, %v104
    %v121 = vpack.c.b16 %v107, %v106
    %v122 = vpack.c.b16 %v109, %v108
    %v123 = vpack.c.b16 %v111, %v110
    %v124 = vpack.c.b16 %v113, %v112
    %v125 = vpack.c.b16 %v115, %v114
    %v126 = vpack.c.b16 %v117, %v116
    %v127 = vpack.c.b16 %v119, %v118
    %136 = vmatpush.bf16.msra.mxu0 %v127
    %137 = vmatpush.bf16.msra.mxu0 %v126
    %138 = vmatpush.bf16.msra.mxu0 %v125
    %139 = vmatpush.bf16.msra.mxu0 %v124
    %140 = vmatpush.bf16.msra.mxu0 %v123
    %141 = vmatpush.bf16.msra.mxu0 %v122
    %142 = vmatpush.bf16.msra.mxu0 %v121
    %143 = vmatpush.bf16.msra.mxu0 %v120
    %144 = vmatmul.bf16.gmra.mxu0 %v67
    %v145 = vpop.f32.mrf.mxu0
    %v146 = vadd.f32 %v86, %v145
    %v147 = vpop.f32.mrf.mxu0
    %148 = vdwg.mxu0
    %v149 = vtanh.pop %v146
    %v150 = vpack.c.bf16 %v149, %v149
    %v151 = vld [vmem:[#allocation7] sm:$0xf]
    %v152 = vld [vmem:[#allocation7 + $0x4] sm:$0xf]
    %v153 = vld [vmem:[#allocation7 + $0x8] sm:$0xf]
    %v154 = vld [vmem:[#allocation7 + $0xc] sm:$0xf]
    %v155 = vld [vmem:[#allocation7 + $0x10] sm:$0xf]
    %v156 = vld [vmem:[#allocation7 + $0x14] sm:$0xf]
    %v157 = vld [vmem:[#allocation7 + $0x18] sm:$0xf]
    %v158 = vld [vmem:[#allocation7 + $0x1c] sm:$0xf]
    %v159 = vld [vmem:[#allocation7 + $0x20] sm:$0xf]
    %v160 = vld [vmem:[#allocation7 + $0x24] sm:$0xf]
    %v161 = vld [vmem:[#allocation7 + $0x28] sm:$0xf]
    %v162 = vld [vmem:[#allocation7 + $0x2c] sm:$0xf]
    %v163 = vld [vmem:[#allocation7 + $0x30] sm:$0xf]
    %v164 = vld [vmem:[#allocation7 + $0x34] sm:$0xf]
    %v165 = vld [vmem:[#allocation7 + $0x38] sm:$0xf]
    %v166 = vld [vmem:[#allocation7 + $0x3c] sm:$0xf]
    %v167 = vld [vmem:[%s4] sm:$0x1]
    %v169 = vperm.slane %v167, 0
    %v187 = vunpack.c.l.b16 %v151
    %v188 = vunpack.c.l.b16 %v152
    %v189 = vunpack.c.l.b16 %v153
    %v190 = vunpack.c.l.b16 %v154
    %v191 = vunpack.c.l.b16 %v155
    %v192 = vunpack.c.l.b16 %v156
    %v193 = vunpack.c.l.b16 %v157
    %v194 = vunpack.c.l.b16 %v158
    %v195 = vunpack.c.l.b16 %v159
    %v196 = vunpack.c.l.b16 %v160
    %v197 = vunpack.c.l.b16 %v161
    %v198 = vunpack.c.l.b16 %v162
    %v199 = vunpack.c.l.b16 %v163
    %v200 = vunpack.c.l.b16 %v164
    %v201 = vunpack.c.l.b16 %v165
    %v202 = vunpack.c.l.b16 %v166
    %v203 = vpack.c.b16 %v188, %v187
    %v204 = vpack.c.b16 %v190, %v189
    %v205 = vpack.c.b16 %v192, %v191
    %v206 = vpack.c.b16 %v194, %v193
    %v207 = vpack.c.b16 %v196, %v195
    %v208 = vpack.c.b16 %v198, %v197
    %v209 = vpack.c.b16 %v200, %v199
    %v210 = vpack.c.b16 %v202, %v201
    %219 = vmatpush.bf16.msra.mxu0 %v210
    %220 = vmatpush.bf16.msra.mxu0 %v209
    %221 = vmatpush.bf16.msra.mxu0 %v208
    %222 = vmatpush.bf16.msra.mxu0 %v207
    %223 = vmatpush.bf16.msra.mxu0 %v206
    %224 = vmatpush.bf16.msra.mxu0 %v205
    %225 = vmatpush.bf16.msra.mxu0 %v204
    %226 = vmatpush.bf16.msra.mxu0 %v203
    %227 = vmatmul.bf16.gmra.mxu0 %v150
    %v228 = vpop.f32.mrf.mxu0
    %v229 = vadd.f32 %v169, %v228
    %v230 = vpop.f32.mrf.mxu0
    %231 = vdwg.mxu0
    %232 = vst [vmem:[#allocation8] sm:$0x3] %v229
    // Predicated region
    $region34: #{tpu_custom_call.1} parent=1 // pred_check
      _
    $region35: #{tpu_custom_call.1} parent=1 // pred_check_branch
      %234 = sbr.rel (0) target = $region37
    $region36: #{tpu_custom_call.1} parent=1 // pred_region
      %236 = vsyncadd [#allocation4], 0
      %s238 = sshll.u32 [#allocation8], 4
      %s239 = int_to_ptr.vmem [resolvable:$true] %s238
      %s240 = sshll.u32 %s5, 4
      %s241 = int_to_ptr.hbm [resolvable:$true] %s240
      %243 = dma.vmem_to_hbm [thread:$0]  %s239, 32, %s241, [#allocation4]
    $region37: #{tpu_custom_call.1} parent=1 // pred_fallthru
      _
    // Predicated region
    $region38: #{tpu_custom_call.1} parent=1 // pred_check
      _
    $region39: #{tpu_custom_call.1} parent=1 // pred_check_branch
      %245 = sbr.rel (0) target = $region41
    $region40: #{tpu_custom_call.1} parent=1 // pred_region
      %247 = dma.done [#allocation4], 32
    $region41: #{tpu_custom_call.1} parent=1 // pred_fallthru
      _
    %248 = vsyncpa [#allocation3], 1
    %249 = vsyncpa [#allocation6], 1
    %250 = vsyncpa [#allocation4], 1

</llo_original>
